<compile_context>
chip_gen: v6e
topology: v6e:2x2x1
jax: 0.10.0
libtpu: 0.0.40
codegen_flags: <defaults>
</compile_context>

<pallas_src>
import jax
import jax.numpy as jnp
from jax.experimental import pallas as pl
from jax.experimental.pallas import tpu as pltpu


# ----------------------------------------------------------------------------
# Kernel
# ----------------------------------------------------------------------------
def dnn_kernel(x_ref, w1_ref, b1_ref, w2_ref, b2_ref, w3_ref, b3_ref, out_ref):
    f32 = jnp.float32
    bf16 = jnp.bfloat16

    x = x_ref[...].astype(bf16)

    h = jnp.dot(x, w1_ref[...], preferred_element_type=f32) + b1_ref[...]
    h = jnp.maximum(h, 0.0).astype(bf16)                      # relu(fc1)

    h = jnp.dot(h, w2_ref[...], preferred_element_type=f32) + b2_ref[...]
    h = jnp.maximum(h, 0.0).astype(bf16)                      # relu(fc2)

    y = jnp.dot(h, w3_ref[...], preferred_element_type=f32) + b3_ref[...]
    out_ref[...] = y.astype(out_ref.dtype)                    # fc3 (unpadded N)


# ----------------------------------------------------------------------------
# Host-side helpers
# ----------------------------------------------------------------------------
def _round_up(x, m):
    return ((x + m - 1) // m) * m


def _pad_to(a, shape):
    pads = [(0, s - d) for d, s in zip(a.shape, shape)]
    return jnp.pad(a, pads)


def _tensorcores_per_chip():
    """2 for v7x (2 TCs/chip), 1 for v5e/v6e (and anything unknown)."""
    try:
        kind = jax.devices()[0].device_kind.lower()
    except Exception:
        return 1
    if "v7" in kind or "tpu7" in kind:
        return 2
    return 1


def make_params(key, input_size, output_size):
    """Deterministic synthetic parameters in math layout (in_features, out_features)."""
    ks = jax.random.split(key, 6)
    n = lambda k, shape: jax.random.normal(k, shape, jnp.float32) * 0.05
    return {
        "w1": n(ks[0], (input_size, 128)), "b1": n(ks[1], (128,)),
        "w2": n(ks[2], (128, 64)),         "b2": n(ks[3], (64,)),
        "w3": n(ks[4], (64, output_size)), "b3": n(ks[5], (output_size,)),
    }


def prepare_kernel_params(p):
    """Pad *internal* feature dims (K dims) to 128 lanes; keep the output head
    unpadded so the HBM writeback stream stays small.  Weights -> bf16,
    biases -> f32.  Padded rows/cols are zero, so the math is unchanged."""
    d_in, h1 = p["w1"].shape
    h2 = p["w2"].shape[1]
    out = p["w3"].shape[1]
    h1p, h2p = _round_up(h1, 128), _round_up(h2, 128)

    kp = {
        "w1": _pad_to(p["w1"], (d_in, h1p)).astype(jnp.bfloat16),
        "b1": _pad_to(p["b1"].reshape(1, -1), (1, h1p)).astype(jnp.float32),
        "w2": _pad_to(p["w2"], (h1p, h2p)).astype(jnp.bfloat16),
        "b2": _pad_to(p["b2"].reshape(1, -1), (1, h2p)).astype(jnp.float32),
        "w3": _pad_to(p["w3"], (h2p, out)).astype(jnp.bfloat16),   # K padded only
        "b3": p["b3"].reshape(1, -1).astype(jnp.float32),          # unpadded
    }
    return kp, out


_TILE_CAP = 4096  # rows; ~0.5 MB of x per buffer -> trivially inside 64 MiB VMEM


def _plan_batch(B, tile_b=None, num_tc=1):
    """Pick (tile_rows, grid_steps).

    - tile rows are a multiple of 8 (f32 sublane tiling)
    - 1-TC chips (v5e/v6e): single big tile whenever the batch fits the cap
    - 2-TC chips (v7x): prefer an even number of grid steps so both
      TensorCores get equal work under dimension_semantics=("parallel",)
    """
    if tile_b is not None:
        tile = _round_up(max(int(tile_b), 8), 8)
        return tile, pl.cdiv(B, tile)

    if num_tc <= 1:
        tile = min(_round_up(max(B, 1), 8), _TILE_CAP)
        return tile, pl.cdiv(B, tile)

    grid = max(2, pl.cdiv(B, _TILE_CAP))
    if grid % 2:
        grid += 1
    tile = _round_up(pl.cdiv(B, grid), 8)
    grid = pl.cdiv(B, tile)
    return tile, grid


PARAM_ORDER = ["w1", "b1", "w2", "b2", "w3", "b3"]


def forward_pallas(x, params, *, tile_b=None):
    B, D = x.shape
    kp, out_size = prepare_kernel_params(params)
    h1p = kp["w1"].shape[1]
    h2p = kp["w2"].shape[1]

    num_tc = _tensorcores_per_chip()
    tile, grid = _plan_batch(B, tile_b, num_tc)
    B_pad = tile * grid
    if B_pad != B:
        x = jnp.pad(x, ((0, B_pad - B), (0, 0)))

    flops = 2 * B_pad * (D * h1p + h1p * h2p + h2p * out_size)
    bytes_accessed = (
        x.size * x.dtype.itemsize
        + sum(int(kp[k].size) * kp[k].dtype.itemsize for k in PARAM_ORDER)
        + B_pad * out_size * 4
    )
    cost = pl.CostEstimate(flops=int(flops), transcendentals=0,
                           bytes_accessed=int(bytes_accessed))

    def run(single_buffer_weights):
        def full_spec(a):
            if single_buffer_weights:
                # Grid-invariant operand: no need for a second pipeline buffer.
                return pl.BlockSpec(a.shape, lambda i: (0, 0),
                                    pipeline_mode=pl.Buffered(1))
            return pl.BlockSpec(a.shape, lambda i: (0, 0))

        in_specs = [pl.BlockSpec((tile, D), lambda i: (i, 0))]
        in_specs += [full_spec(kp[k]) for k in PARAM_ORDER]
        out_specs = pl.BlockSpec((tile, out_size), lambda i: (i, 0))

        return pl.pallas_call(
            dnn_kernel,
            out_shape=jax.ShapeDtypeStruct((B_pad, out_size), jnp.float32),
            grid=(grid,),
            in_specs=in_specs,
            out_specs=out_specs,
            compiler_params=pltpu.CompilerParams(
                dimension_semantics=("parallel",)),
            cost_estimate=cost,
        )(x, *[kp[k] for k in PARAM_ORDER])

    try:
        out = run(True)
    except Exception:
        # Fallback if this JAX build rejects pipeline_mode=pl.Buffered(1).
        out = run(False)

    return out[:B, :out_size]


# ----------------------------------------------------------------------------
# Pure-JAX f32 reference (matches the PyTorch DNN forward)
# ----------------------------------------------------------------------------
def forward_ref(x, p):
    h = jax.nn.relu(x @ p["w1"] + p["b1"])
    h = jax.nn.relu(h @ p["w2"] + p["b2"])
    return h @ p["w3"] + p["b3"]


if __name__ == "__main__":
    input_size, output_size = 32, 8
    B = 16

    key = jax.random.PRNGKey(0)
    kx, kp = jax.random.split(key)
    x = jax.random.normal(kx, (B, input_size), jnp.float32)
    params = make_params(kp, input_size, output_size)

    out = forward_pallas(x, params)
    out = jax.block_until_ready(out)

    ref = forward_ref(x, params)
    assert out.shape == (B, output_size)
    assert jnp.allclose(out, ref, rtol=2e-2, atol=2e-2), (
        "mismatch vs reference, max abs err = "
        f"{float(jnp.max(jnp.abs(out - ref)))}")

    print("KERNEL_OK")
</pallas_src>

<mosaic_0001>
module attributes {stable_mosaic.version = 11 : i64} {
  func.func @dnn_kernel(%arg0: i32, %arg1: memref<16x32xf32, #tpu.memory_space<vmem>>, %arg2: memref<32x128xbf16, #tpu.memory_space<vmem>>, %arg3: memref<1x128xf32, #tpu.memory_space<vmem>>, %arg4: memref<128x128xbf16, #tpu.memory_space<vmem>>, %arg5: memref<1x128xf32, #tpu.memory_space<vmem>>, %arg6: memref<128x8xbf16, #tpu.memory_space<vmem>>, %arg7: memref<1x8xf32, #tpu.memory_space<vmem>>, %arg8: memref<16x8xf32, #tpu.memory_space<vmem>>) attributes {dimension_semantics = [#tpu.dimension_semantics<parallel>], iteration_bounds = array<i64: 1>, scalar_prefetch = 0 : i64, scratch_operands = 0 : i64, tpu.core_type = #tpu.core_type<tc>, window_params = [{transform_indices = @transform_0, window_bounds = array<i64: 16, 32>}, {pipeline_mode = #tpu.pipeline_mode<synchronous>, transform_indices = @transform_1, window_bounds = array<i64: 32, 128>}, {pipeline_mode = #tpu.pipeline_mode<synchronous>, transform_indices = @transform_2, window_bounds = array<i64: 1, 128>}, {pipeline_mode = #tpu.pipeline_mode<synchronous>, transform_indices = @transform_3, window_bounds = array<i64: 128, 128>}, {pipeline_mode = #tpu.pipeline_mode<synchronous>, transform_indices = @transform_4, window_bounds = array<i64: 1, 128>}, {pipeline_mode = #tpu.pipeline_mode<synchronous>, transform_indices = @transform_5, window_bounds = array<i64: 128, 8>}, {pipeline_mode = #tpu.pipeline_mode<synchronous>, transform_indices = @transform_6, window_bounds = array<i64: 1, 8>}, {transform_indices = @transform_7, window_bounds = array<i64: 16, 8>}]} {
    %c0 = arith.constant 0 : index
    %c0_0 = arith.constant 0 : index
    %0 = vector.load %arg1[%c0, %c0_0] : memref<16x32xf32, #tpu.memory_space<vmem>>, vector<16x32xf32>
    %1 = arith.truncf %0 : vector<16x32xf32> to vector<16x32xbf16>
    %c0_1 = arith.constant 0 : index
    %c0_2 = arith.constant 0 : index
    %2 = vector.load %arg2[%c0_1, %c0_2] : memref<32x128xbf16, #tpu.memory_space<vmem>>, vector<32x128xbf16>
    %cst = arith.constant dense<0.000000e+00> : vector<16x128xf32>
    %3 = tpu.matmul %1, %2, %cst {dimension_numbers = #tpu.dot_dimension_numbers<[1], [0], [0], [1], [0, 0, 1, 1], [], []>} : vector<16x32xbf16>, vector<32x128xbf16>, vector<16x128xf32> -> vector<16x128xf32>
    %c0_3 = arith.constant 0 : index
    %c0_4 = arith.constant 0 : index
    %4 = vector.load %arg3[%c0_3, %c0_4] : memref<1x128xf32, #tpu.memory_space<vmem>>, vector<1x128xf32>
    %5 = vector.broadcast %4 : vector<1x128xf32> to vector<16x128xf32>
    %6 = arith.addf %3, %5 : vector<16x128xf32>
    %cst_5 = arith.constant 0.000000e+00 : f32
    %7 = vector.broadcast %cst_5 : f32 to vector<16x128xf32>
    %8 = arith.maximumf %6, %7 : vector<16x128xf32>
    %9 = arith.truncf %8 : vector<16x128xf32> to vector<16x128xbf16>
    %c0_6 = arith.constant 0 : index
    %c0_7 = arith.constant 0 : index
    %10 = vector.load %arg4[%c0_6, %c0_7] : memref<128x128xbf16, #tpu.memory_space<vmem>>, vector<128x128xbf16>
    %cst_8 = arith.constant dense<0.000000e+00> : vector<16x128xf32>
    %11 = tpu.matmul %9, %10, %cst_8 {dimension_numbers = #tpu.dot_dimension_numbers<[1], [0], [0], [1], [0, 0, 1, 1], [], []>} : vector<16x128xbf16>, vector<128x128xbf16>, vector<16x128xf32> -> vector<16x128xf32>
    %c0_9 = arith.constant 0 : index
    %c0_10 = arith.constant 0 : index
    %12 = vector.load %arg5[%c0_9, %c0_10] : memref<1x128xf32, #tpu.memory_space<vmem>>, vector<1x128xf32>
    %13 = vector.broadcast %12 : vector<1x128xf32> to vector<16x128xf32>
    %14 = arith.addf %11, %13 : vector<16x128xf32>
    %cst_11 = arith.constant 0.000000e+00 : f32
    %15 = vector.broadcast %cst_11 : f32 to vector<16x128xf32>
    %16 = arith.maximumf %14, %15 : vector<16x128xf32>
    %17 = arith.truncf %16 : vector<16x128xf32> to vector<16x128xbf16>
    %c0_12 = arith.constant 0 : index
    %c0_13 = arith.constant 0 : index
    %18 = vector.load %arg6[%c0_12, %c0_13] : memref<128x8xbf16, #tpu.memory_space<vmem>>, vector<128x8xbf16>
    %cst_14 = arith.constant dense<0.000000e+00> : vector<16x8xf32>
    %19 = tpu.matmul %17, %18, %cst_14 {dimension_numbers = #tpu.dot_dimension_numbers<[1], [0], [0], [1], [0, 0, 1, 1], [], []>} : vector<16x128xbf16>, vector<128x8xbf16>, vector<16x8xf32> -> vector<16x8xf32>
    %c0_15 = arith.constant 0 : index
    %c0_16 = arith.constant 0 : index
    %20 = vector.load %arg7[%c0_15, %c0_16] : memref<1x8xf32, #tpu.memory_space<vmem>>, vector<1x8xf32>
    %21 = vector.broadcast %20 : vector<1x8xf32> to vector<16x8xf32>
    %22 = arith.addf %19, %21 : vector<16x8xf32>
    %c0_17 = arith.constant 0 : index
    %c0_18 = arith.constant 0 : index
    %23 = vector.load %arg8[%c0_17, %c0_18] : memref<16x8xf32, #tpu.memory_space<vmem>>, vector<16x8xf32>
    tpu.vector_store %arg8[%c0_17, %c0_18], %22 {strides = array<i32>} : memref<16x8xf32, #tpu.memory_space<vmem>>, vector<16x8xf32>,
    return
  }
  func.func @transform_0(%arg0: i32) -> (i32, i32) {
    %c0_i32 = arith.constant 0 : i32
    %c0_i32_0 = arith.constant 0 : i32
    return %arg0, %c0_i32 : i32, i32
  }
  func.func @transform_1(%arg0: i32) -> (i32, i32) {
    %c0_i32 = arith.constant 0 : i32
    %c0_i32_0 = arith.constant 0 : i32
    %c0_i32_1 = arith.constant 0 : i32
    return %c0_i32, %c0_i32_0 : i32, i32
  }
  func.func @transform_2(%arg0: i32) -> (i32, i32) {
    %c0_i32 = arith.constant 0 : i32
    %c0_i32_0 = arith.constant 0 : i32
    %c0_i32_1 = arith.constant 0 : i32
    return %c0_i32, %c0_i32_0 : i32, i32
  }
  func.func @transform_3(%arg0: i32) -> (i32, i32) {
    %c0_i32 = arith.constant 0 : i32
    %c0_i32_0 = arith.constant 0 : i32
    %c0_i32_1 = arith.constant 0 : i32
    return %c0_i32, %c0_i32_0 : i32, i32
  }
  func.func @transform_4(%arg0: i32) -> (i32, i32) {
    %c0_i32 = arith.constant 0 : i32
    %c0_i32_0 = arith.constant 0 : i32
    %c0_i32_1 = arith.constant 0 : i32
    return %c0_i32, %c0_i32_0 : i32, i32
  }
  func.func @transform_5(%arg0: i32) -> (i32, i32) {
    %c0_i32 = arith.constant 0 : i32
    %c0_i32_0 = arith.constant 0 : i32
    %c0_i32_1 = arith.constant 0 : i32
    return %c0_i32, %c0_i32_0 : i32, i32
  }
  func.func @transform_6(%arg0: i32) -> (i32, i32) {
    %c0_i32 = arith.constant 0 : i32
    %c0_i32_0 = arith.constant 0 : i32
    %c0_i32_1 = arith.constant 0 : i32
    return %c0_i32, %c0_i32_0 : i32, i32
  }
  func.func @transform_7(%arg0: i32) -> (i32, i32) {
    %c0_i32 = arith.constant 0 : i32
    %c0_i32_0 = arith.constant 0 : i32
    return %arg0, %c0_i32 : i32, i32
  }
}

module attributes {stable_mosaic.version = 11 : i64} {
  func.func @dnn_kernel(%arg0: i32, %arg1: memref<16x32xf32, #tpu.memory_space<vmem>>, %arg2: memref<32x128xbf16, #tpu.memory_space<vmem>>, %arg3: memref<1x128xf32, #tpu.memory_space<vmem>>, %arg4: memref<128x128xbf16, #tpu.memory_space<vmem>>, %arg5: memref<1x128xf32, #tpu.memory_space<vmem>>, %arg6: memref<128x8xbf16, #tpu.memory_space<vmem>>, %arg7: memref<1x8xf32, #tpu.memory_space<vmem>>, %arg8: memref<16x8xf32, #tpu.memory_space<vmem>>) attributes {dimension_semantics = [#tpu.dimension_semantics<parallel>], iteration_bounds = array<i64: 1>, scalar_prefetch = 0 : i64, scratch_operands = 0 : i64, tpu.core_type = #tpu.core_type<tc>, window_params = [{transform_indices = @transform_0, window_bounds = array<i64: 16, 32>}, {pipeline_mode = #tpu.pipeline_mode<synchronous>, transform_indices = @transform_1, window_bounds = array<i64: 32, 128>}, {pipeline_mode = #tpu.pipeline_mode<synchronous>, transform_indices = @transform_2, window_bounds = array<i64: 1, 128>}, {pipeline_mode = #tpu.pipeline_mode<synchronous>, transform_indices = @transform_3, window_bounds = array<i64: 128, 128>}, {pipeline_mode = #tpu.pipeline_mode<synchronous>, transform_indices = @transform_4, window_bounds = array<i64: 1, 128>}, {pipeline_mode = #tpu.pipeline_mode<synchronous>, transform_indices = @transform_5, window_bounds = array<i64: 128, 8>}, {pipeline_mode = #tpu.pipeline_mode<synchronous>, transform_indices = @transform_6, window_bounds = array<i64: 1, 8>}, {transform_indices = @transform_7, window_bounds = array<i64: 16, 8>}]} {
    %c0 = arith.constant 0 : index
    %c0_0 = arith.constant 0 : index
    %0 = vector.load %arg1[%c0, %c0_0] : memref<16x32xf32, #tpu.memory_space<vmem>>, vector<16x32xf32>
    %1 = arith.truncf %0 : vector<16x32xf32> to vector<16x32xbf16>
    %c0_1 = arith.constant 0 : index
    %c0_2 = arith.constant 0 : index
    %2 = vector.load %arg2[%c0_1, %c0_2] : memref<32x128xbf16, #tpu.memory_space<vmem>>, vector<32x128xbf16>
    %cst = arith.constant dense<0.000000e+00> : vector<16x128xf32>
    %3 = tpu.matmul %1, %2, %cst {dimension_numbers = #tpu.dot_dimension_numbers<[1], [0], [0], [1], [0, 0, 1, 1], [], []>} : vector<16x32xbf16>, vector<32x128xbf16>, vector<16x128xf32> -> vector<16x128xf32>
    %c0_3 = arith.constant 0 : index
    %c0_4 = arith.constant 0 : index
    %4 = vector.load %arg3[%c0_3, %c0_4] : memref<1x128xf32, #tpu.memory_space<vmem>>, vector<1x128xf32>
    %5 = vector.broadcast %4 : vector<1x128xf32> to vector<16x128xf32>
    %6 = arith.addf %3, %5 : vector<16x128xf32>
    %cst_5 = arith.constant 0.000000e+00 : f32
    %7 = vector.broadcast %cst_5 : f32 to vector<16x128xf32>
    %8 = arith.maximumf %6, %7 : vector<16x128xf32>
    %9 = arith.truncf %8 : vector<16x128xf32> to vector<16x128xbf16>
    %c0_6 = arith.constant 0 : index
    %c0_7 = arith.constant 0 : index
    %10 = vector.load %arg4[%c0_6, %c0_7] : memref<128x128xbf16, #tpu.memory_space<vmem>>, vector<128x128xbf16>
    %cst_8 = arith.constant dense<0.000000e+00> : vector<16x128xf32>
    %11 = tpu.matmul %9, %10, %cst_8 {dimension_numbers = #tpu.dot_dimension_numbers<[1], [0], [0], [1], [0, 0, 1, 1], [], []>} : vector<16x128xbf16>, vector<128x128xbf16>, vector<16x128xf32> -> vector<16x128xf32>
    %c0_9 = arith.constant 0 : index
    %c0_10 = arith.constant 0 : index
    %12 = vector.load %arg5[%c0_9, %c0_10] : memref<1x128xf32, #tpu.memory_space<vmem>>, vector<1x128xf32>
    %13 = vector.broadcast %12 : vector<1x128xf32> to vector<16x128xf32>
    %14 = arith.addf %11, %13 : vector<16x128xf32>
    %cst_11 = arith.constant 0.000000e+00 : f32
    %15 = vector.broadcast %cst_11 : f32 to vector<16x128xf32>
    %16 = arith.maximumf %14, %15 : vector<16x128xf32>
    %17 = arith.truncf %16 : vector<16x128xf32> to vector<16x128xbf16>
    %c0_12 = arith.constant 0 : index
    %c0_13 = arith.constant 0 : index
    %18 = vector.load %arg6[%c0_12, %c0_13] : memref<128x8xbf16, #tpu.memory_space<vmem>>, vector<128x8xbf16>
    %cst_14 = arith.constant dense<0.000000e+00> : vector<16x8xf32>
    %19 = tpu.matmul %17, %18, %cst_14 {dimension_numbers = #tpu.dot_dimension_numbers<[1], [0], [0], [1], [0, 0, 1, 1], [], []>} : vector<16x128xbf16>, vector<128x8xbf16>, vector<16x8xf32> -> vector<16x8xf32>
    %c0_15 = arith.constant 0 : index
    %c0_16 = arith.constant 0 : index
    %20 = vector.load %arg7[%c0_15, %c0_16] : memref<1x8xf32, #tpu.memory_space<vmem>>, vector<1x8xf32>
    %21 = vector.broadcast %20 : vector<1x8xf32> to vector<16x8xf32>
    %22 = arith.addf %19, %21 : vector<16x8xf32>
    %c0_17 = arith.constant 0 : index
    %c0_18 = arith.constant 0 : index
    %23 = vector.load %arg8[%c0_17, %c0_18] : memref<16x8xf32, #tpu.memory_space<vmem>>, vector<16x8xf32>
    tpu.vector_store %arg8[%c0_17, %c0_18], %22 {strides = array<i32>} : memref<16x8xf32, #tpu.memory_space<vmem>>, vector<16x8xf32>,
    return
  }
  func.func @transform_0(%arg0: i32) -> (i32, i32) {
    %c0_i32 = arith.constant 0 : i32
    %c0_i32_0 = arith.constant 0 : i32
    return %arg0, %c0_i32 : i32, i32
  }
  func.func @transform_1(%arg0: i32) -> (i32, i32) {
    %c0_i32 = arith.constant 0 : i32
    %c0_i32_0 = arith.constant 0 : i32
    %c0_i32_1 = arith.constant 0 : i32
    return %c0_i32, %c0_i32_0 : i32, i32
  }
  func.func @transform_2(%arg0: i32) -> (i32, i32) {
    %c0_i32 = arith.constant 0 : i32
    %c0_i32_0 = arith.constant 0 : i32
    %c0_i32_1 = arith.constant 0 : i32
    return %c0_i32, %c0_i32_0 : i32, i32
  }
  func.func @transform_3(%arg0: i32) -> (i32, i32) {
    %c0_i32 = arith.constant 0 : i32
    %c0_i32_0 = arith.constant 0 : i32
    %c0_i32_1 = arith.constant 0 : i32
    return %c0_i32, %c0_i32_0 : i32, i32
  }
  func.func @transform_4(%arg0: i32) -> (i32, i32) {
    %c0_i32 = arith.constant 0 : i32
    %c0_i32_0 = arith.constant 0 : i32
    %c0_i32_1 = arith.constant 0 : i32
    return %c0_i32, %c0_i32_0 : i32, i32
  }
  func.func @transform_5(%arg0: i32) -> (i32, i32) {
    %c0_i32 = arith.constant 0 : i32
    %c0_i32_0 = arith.constant 0 : i32
    %c0_i32_1 = arith.constant 0 : i32
    return %c0_i32, %c0_i32_0 : i32, i32
  }
  func.func @transform_6(%arg0: i32) -> (i32, i32) {
    %c0_i32 = arith.constant 0 : i32
    %c0_i32_0 = arith.constant 0 : i32
    %c0_i32_1 = arith.constant 0 : i32
    return %c0_i32, %c0_i32_0 : i32, i32
  }
  func.func @transform_7(%arg0: i32) -> (i32, i32) {
    %c0_i32 = arith.constant 0 : i32
    %c0_i32_0 = arith.constant 0 : i32
    return %arg0, %c0_i32 : i32, i32
  }
}

</mosaic_0001>

<llo_original>
// kernel: tpu_custom_call.1
$region0: #{tpu_custom_call.1}
  #allocation0 [shape = 'u32[]', space=smem, size = 0x4, offset = 0x4, fixed_abs, tag = 'smem constant byte address 0x4 - core index']
  #allocation1 [shape = 'u32[144,128]{1,0:T(1,128)}', space=vmem, size = 0x12000, scoped, tag = 'internal scratch']
  %s0 = inlined_call_operand.hbm [shape: f32[16,32], index: 0, kind: input, shape index: {}]
  %s1 = inlined_call_operand.hbm [shape: bf16[32,128], index: 1, kind: input, shape index: {}]
  %s2 = inlined_call_operand.vmem [shape: f32[1,128], index: 2, kind: input, shape index: {}]
  %s3 = inlined_call_operand.vmem [shape: bf16[128,128], index: 3, kind: input, shape index: {}]
  %s4 = inlined_call_operand.vmem [shape: f32[1,128], index: 4, kind: input, shape index: {}]
  %s5 = inlined_call_operand.vmem [shape: bf16[128,8], index: 5, kind: input, shape index: {}]
  %s6 = inlined_call_operand.vmem [shape: f32[1,8], index: 6, kind: input, shape index: {}]
  %s7 = inlined_call_operand.vmem [shape: f32[16,8], index: 7, kind: output, shape index: {}]
  %s8 = sld [smem:[#allocation0]]
  $region46: #{tpu_custom_call.1} parent=0
    _
  %s10 = ssub.s32 1, %s8
  %s11 = scalar_select 0, %s10, %s8
  $region1: #{tpu_custom_call.1} parent=0
    #allocation2 [shape = 'u8[8192]{0}', space=vmem, size = 0x2000, scoped, tag = 'input window, operand 0, single buffered']
    #allocation3 [shape = 's32[1]{0}', space=sflag, size = 0x4, scoped, tag = 'scoped memory for tpu_custom_call.1']
    #allocation4 [shape = 'u8[8192]{0}', space=vmem, size = 0x2000, scoped, tag = 'input window, operand 1, single buffered']
    #allocation5 [shape = 's32[1]{0}', space=sflag, size = 0x4, scoped, tag = 'scoped memory for tpu_custom_call.1']
    %12 = vsyncpa [#allocation3], 0
    %13 = vsyncpa [#allocation5], 0
    // Predicated region
    $region2: #{tpu_custom_call.1} parent=1 // pred_check
      _
    $region3: #{tpu_custom_call.1} parent=1 // pred_check_branch
      %15 = sbr.rel (0) target = $region5
    $region4: #{tpu_custom_call.1} parent=1 // pred_region
      %s17 = ssub.s32 256, 256
      %18 = vsyncadd [#allocation3], %s17
      %s19 = sshll.u32 [#allocation2], 4
      %s20 = int_to_ptr.vmem [resolvable:$true] %s19
      %25 = dma.hbm_to_vmem [thread:$0]  %s0, 256, %s20, [#allocation3], 128, 128, 8
    $region5: #{tpu_custom_call.1} parent=1 // pred_fallthru
      _
    // Predicated region
    $region6: #{tpu_custom_call.1} parent=1 // pred_check
      _
    $region7: #{tpu_custom_call.1} parent=1 // pred_check_branch
      %27 = sbr.rel (0) target = $region9
    $region8: #{tpu_custom_call.1} parent=1 // pred_region
      %s29 = ssub.s32 256, 256
      %30 = vsyncadd [#allocation5], %s29
      %s31 = sshll.u32 [#allocation4], 4
      %s32 = int_to_ptr.vmem [resolvable:$true] %s31
      %37 = dma.hbm_to_vmem [thread:$0]  %s1, 256, %s32, [#allocation5], 64, 64, 4
    $region9: #{tpu_custom_call.1} parent=1 // pred_fallthru
      _
    // Predicated region
    $region10: #{tpu_custom_call.1} parent=1 // pred_check
      _
    $region11: #{tpu_custom_call.1} parent=1 // pred_check_branch
      %39 = sbr.rel (0) target = $region13
    $region12: #{tpu_custom_call.1} parent=1 // pred_region
      _
    $region13: #{tpu_custom_call.1} parent=1 // pred_fallthru
      _
    // Predicated region
    $region14: #{tpu_custom_call.1} parent=1 // pred_check
      _
    $region15: #{tpu_custom_call.1} parent=1 // pred_check_branch
      %41 = sbr.rel (0) target = $region17
    $region16: #{tpu_custom_call.1} parent=1 // pred_region
      _
    $region17: #{tpu_custom_call.1} parent=1 // pred_fallthru
      _
    // Predicated region
    $region18: #{tpu_custom_call.1} parent=1 // pred_check
      _
    $region19: #{tpu_custom_call.1} parent=1 // pred_check_branch
      %43 = sbr.rel (0) target = $region21
    $region20: #{tpu_custom_call.1} parent=1 // pred_region
      _
    $region21: #{tpu_custom_call.1} parent=1 // pred_fallthru
      _
    // Predicated region
    $region22: #{tpu_custom_call.1} parent=1 // pred_check
      _
    $region23: #{tpu_custom_call.1} parent=1 // pred_check_branch
      %45 = sbr.rel (0) target = $region25
    $region24: #{tpu_custom_call.1} parent=1 // pred_region
      _
    $region25: #{tpu_custom_call.1} parent=1 // pred_fallthru
      _
    // Predicated region
    $region26: #{tpu_custom_call.1} parent=1 // pred_check
      _
    $region27: #{tpu_custom_call.1} parent=1 // pred_check_branch
      %47 = sbr.rel (0) target = $region29
    $region28: #{tpu_custom_call.1} parent=1 // pred_region
      _
    $region29: #{tpu_custom_call.1} parent=1 // pred_fallthru
      _
    // Predicated region
    $region30: #{tpu_custom_call.1} parent=1 // pred_check
      _
    $region31: #{tpu_custom_call.1} parent=1 // pred_check_branch
      %49 = sbr.rel (0) target = $region33
    $region32: #{tpu_custom_call.1} parent=1 // pred_region
      %50 = dma.done [#allocation3], 256
    $region33: #{tpu_custom_call.1} parent=1 // pred_fallthru
      _
    // Predicated region
    $region34: #{tpu_custom_call.1} parent=1 // pred_check
      _
    $region35: #{tpu_custom_call.1} parent=1 // pred_check_branch
      %52 = sbr.rel (0) target = $region37
    $region36: #{tpu_custom_call.1} parent=1 // pred_region
      %53 = dma.done [#allocation5], 256
    $region37: #{tpu_custom_call.1} parent=1 // pred_fallthru
      _
    %v55 = vld [vmem:[#allocation2] sm:$0xff]
    %v56 = vld [vmem:[#allocation2 + $0x8] sm:$0xff]
    %v57 = vpack.c.bf16 %v56, %v55
    %v58 = vld [vmem:[#allocation4] sm:$0xf]
    %v59 = vld [vmem:[#allocation4 + $0x4] sm:$0xf]
    %v60 = vld [vmem:[#allocation4 + $0x8] sm:$0xf]
    %v61 = vld [vmem:[#allocation4 + $0xc] sm:$0xf]
    %v62 = vld [vmem:[%s2] sm:$0x1]
    %v64 = vlaneseq
    %v65 = vshrl.u32 %v64, 7
    %v66 = vsub.s32 0, %v65
    %v67 = vrot.slane %v62, %v66
    %v73 = vunpack.c.l.b16 %v58
    %v74 = vunpack.c.l.b16 %v59
    %v75 = vunpack.c.l.b16 %v60
    %v76 = vunpack.c.l.b16 %v61
    %v77 = vpack.c.b16 %v74, %v73
    %v78 = vpack.c.b16 %v76, %v75
    %vm81 = vcmask 261120
    %v83 = vsel %vm81, %v57, 0
    %85 = vmatprep.subr.bf16.mxu0 0
    %86 = vmatpush1.bf16.msra.mxu0 0
    %87 = vmatprep.subr.bf16.mxu0 0
    %88 = vmatpush1.bf16.msra.mxu0 0
    %89 = vmatprep.subr.bf16.mxu0 0
    %90 = vmatpush1.bf16.msra.mxu0 0
    %91 = vmatprep.subr.bf16.mxu0 0
    %92 = vmatpush1.bf16.msra.mxu0 0
    %93 = vmatprep.subr.bf16.mxu0 0
    %94 = vmatpush1.bf16.msra.mxu0 0
    %95 = vmatprep.subr.bf16.mxu0 0
    %96 = vmatpush1.bf16.msra.mxu0 0
    %97 = vmatprep.subr.bf16.mxu0 0
    %98 = vmatpush1.bf16.msra.mxu0 %v78
    %99 = vmatprep.subr.bf16.mxu0 0
    %100 = vmatpush1.bf16.msra.mxu0 %v77
    %101 = vmatprep.subr.bf16.mxu0 0
    %102 = vmatpush2.bf16.msra.mxu0 0
    %103 = vmatprep.subr.bf16.mxu0 0
    %104 = vmatpush2.bf16.msra.mxu0 0
    %105 = vmatprep.subr.bf16.mxu0 0
    %106 = vmatpush2.bf16.msra.mxu0 0
    %107 = vmatprep.subr.bf16.mxu0 0
    %108 = vmatpush2.bf16.msra.mxu0 0
    %109 = vmatprep.subr.bf16.mxu0 0
    %110 = vmatpush2.bf16.msra.mxu0 0
    %111 = vmatprep.subr.bf16.mxu0 0
    %112 = vmatpush2.bf16.msra.mxu0 0
    %113 = vmatprep.subr.bf16.mxu0 0
    %114 = vmatpush2.bf16.msra.mxu0 0
    %115 = vmatprep.subr.bf16.mxu0 0
    %116 = vmatpush2.bf16.msra.mxu0 0
    %117 = vmatprep.mubr.bf16.mxu0 0
    %118 = vmatmul.mubr.bf16.gmra.mxu0 %v83
    %v119 = vpop.f32.mrf.mxu0
    %v120 = vadd.f32 %v67, %v119
    %v121 = vpop.f32.mrf.mxu0
    %v122 = vpop.f32.mrf.mxu0
    %v123 = vadd.f32 %v67, %v122
    %v124 = vpop.f32.mrf.mxu0
    %125 = vdwg.mxu0
    %v126 = vmax.f32 %v120, 0.0
    %v127 = vmax.f32 %v123, 0.0
    %v128 = vpack.c.bf16 %v127, %v126
    %v129 = vld [vmem:[%s3] sm:$0xf]
    %v130 = vld [vmem:[%s3 + $0x4] sm:$0xf]
    %v131 = vld [vmem:[%s3 + $0x8] sm:$0xf]
    %v132 = vld [vmem:[%s3 + $0xc] sm:$0xf]
    %v133 = vld [vmem:[%s3 + $0x10] sm:$0xf]
    %v134 = vld [vmem:[%s3 + $0x14] sm:$0xf]
    %v135 = vld [vmem:[%s3 + $0x18] sm:$0xf]
    %v136 = vld [vmem:[%s3 + $0x1c] sm:$0xf]
    %v137 = vld [vmem:[%s3 + $0x20] sm:$0xf]
    %v138 = vld [vmem:[%s3 + $0x24] sm:$0xf]
    %v139 = vld [vmem:[%s3 + $0x28] sm:$0xf]
    %v140 = vld [vmem:[%s3 + $0x2c] sm:$0xf]
    %v141 = vld [vmem:[%s3 + $0x30] sm:$0xf]
    %v142 = vld [vmem:[%s3 + $0x34] sm:$0xf]
    %v143 = vld [vmem:[%s3 + $0x38] sm:$0xf]
    %v144 = vld [vmem:[%s3 + $0x3c] sm:$0xf]
    %v145 = vld [vmem:[%s4] sm:$0x1]
    %v147 = vlaneseq
    %v148 = vshrl.u32 %v147, 7
    %v149 = vsub.s32 0, %v148
    %v150 = vrot.slane %v145, %v149
    %v168 = vunpack.c.l.b16 %v129
    %v169 = vunpack.c.l.b16 %v130
    %v170 = vunpack.c.l.b16 %v131
    %v171 = vunpack.c.l.b16 %v132
    %v172 = vunpack.c.l.b16 %v133
    %v173 = vunpack.c.l.b16 %v134
    %v174 = vunpack.c.l.b16 %v135
    %v175 = vunpack.c.l.b16 %v136
    %v176 = vunpack.c.l.b16 %v137
    %v177 = vunpack.c.l.b16 %v138
    %v178 = vunpack.c.l.b16 %v139
    %v179 = vunpack.c.l.b16 %v140
    %v180 = vunpack.c.l.b16 %v141
    %v181 = vunpack.c.l.b16 %v142
    %v182 = vunpack.c.l.b16 %v143
    %v183 = vunpack.c.l.b16 %v144
    %v184 = vpack.c.b16 %v169, %v168
    %v185 = vpack.c.b16 %v171, %v170
    %v186 = vpack.c.b16 %v173, %v172
    %v187 = vpack.c.b16 %v175, %v174
    %v188 = vpack.c.b16 %v177, %v176
    %v189 = vpack.c.b16 %v179, %v178
    %v190 = vpack.c.b16 %v181, %v180
    %v191 = vpack.c.b16 %v183, %v182
    %200 = vmatprep.subr.bf16.mxu0 0
    %201 = vmatpush1.bf16.msra.mxu0 %v191
    %202 = vmatprep.subr.bf16.mxu0 0
    %203 = vmatpush1.bf16.msra.mxu0 %v190
    %204 = vmatprep.subr.bf16.mxu0 0
    %205 = vmatpush1.bf16.msra.mxu0 %v189
    %206 = vmatprep.subr.bf16.mxu0 0
    %207 = vmatpush1.bf16.msra.mxu0 %v188
    %208 = vmatprep.subr.bf16.mxu0 0
    %209 = vmatpush1.bf16.msra.mxu0 %v187
    %210 = vmatprep.subr.bf16.mxu0 0
    %211 = vmatpush1.bf16.msra.mxu0 %v186
    %212 = vmatprep.subr.bf16.mxu0 0
    %213 = vmatpush1.bf16.msra.mxu0 %v185
    %214 = vmatprep.subr.bf16.mxu0 0
    %215 = vmatpush1.bf16.msra.mxu0 %v184
    %216 = vmatprep.subr.bf16.mxu0 0
    %217 = vmatpush2.bf16.msra.mxu0 0
    %218 = vmatprep.subr.bf16.mxu0 0
    %219 = vmatpush2.bf16.msra.mxu0 0
    %220 = vmatprep.subr.bf16.mxu0 0
    %221 = vmatpush2.bf16.msra.mxu0 0
    %222 = vmatprep.subr.bf16.mxu0 0
    %223 = vmatpush2.bf16.msra.mxu0 0
    %224 = vmatprep.subr.bf16.mxu0 0
    %225 = vmatpush2.bf16.msra.mxu0 0
    %226 = vmatprep.subr.bf16.mxu0 0
    %227 = vmatpush2.bf16.msra.mxu0 0
    %228 = vmatprep.subr.bf16.mxu0 0
    %229 = vmatpush2.bf16.msra.mxu0 0
    %230 = vmatprep.subr.bf16.mxu0 0
    %231 = vmatpush2.bf16.msra.mxu0 0
    %232 = vmatprep.mubr.bf16.mxu0 0
    %233 = vmatmul.mubr.bf16.gmra.mxu0 %v128
    %v234 = vpop.f32.mrf.mxu0
    %v235 = vadd.f32 %v150, %v234
    %v236 = vpop.f32.mrf.mxu0
    %v237 = vpop.f32.mrf.mxu0
    %v238 = vadd.f32 %v150, %v237
    %v239 = vpop.f32.mrf.mxu0
    %240 = vdwg.mxu0
    %v241 = vmax.f32 %v235, 0.0
    %v242 = vmax.f32 %v238, 0.0
    %v243 = vpack.c.bf16 %v242, %v241
    %v244 = vld [vmem:[%s5] sm:$0xf]
    %v245 = vld [vmem:[%s5 + $0x4] sm:$0xf]
    %v246 = vld [vmem:[%s5 + $0x8] sm:$0xf]
    %v247 = vld [vmem:[%s5 + $0xc] sm:$0xf]
    %v248 = vld [vmem:[%s5 + $0x10] sm:$0xf]
    %v249 = vld [vmem:[%s5 + $0x14] sm:$0xf]
    %v250 = vld [vmem:[%s5 + $0x18] sm:$0xf]
    %v251 = vld [vmem:[%s5 + $0x1c] sm:$0xf]
    %v252 = vld [vmem:[%s5 + $0x20] sm:$0xf]
    %v253 = vld [vmem:[%s5 + $0x24] sm:$0xf]
    %v254 = vld [vmem:[%s5 + $0x28] sm:$0xf]
    %v255 = vld [vmem:[%s5 + $0x2c] sm:$0xf]
    %v256 = vld [vmem:[%s5 + $0x30] sm:$0xf]
    %v257 = vld [vmem:[%s5 + $0x34] sm:$0xf]
    %v258 = vld [vmem:[%s5 + $0x38] sm:$0xf]
    %v259 = vld [vmem:[%s5 + $0x3c] sm:$0xf]
    %v260 = vld [vmem:[%s6] sm:$0x1]
    %v262 = vlaneseq
    %v263 = vshrl.u32 %v262, 7
    %v264 = vsub.s32 0, %v263
    %v265 = vrot.slane %v260, %v264
    %v283 = vunpack.c.l.b16 %v244
    %v284 = vunpack.c.l.b16 %v245
    %v285 = vunpack.c.l.b16 %v246
    %v286 = vunpack.c.l.b16 %v247
    %v287 = vunpack.c.l.b16 %v248
    %v288 = vunpack.c.l.b16 %v249
    %v289 = vunpack.c.l.b16 %v250
    %v290 = vunpack.c.l.b16 %v251
    %v291 = vunpack.c.l.b16 %v252
    %v292 = vunpack.c.l.b16 %v253
    %v293 = vunpack.c.l.b16 %v254
    %v294 = vunpack.c.l.b16 %v255
    %v295 = vunpack.c.l.b16 %v256
    %v296 = vunpack.c.l.b16 %v257
    %v297 = vunpack.c.l.b16 %v258
    %v298 = vunpack.c.l.b16 %v259
    %v299 = vpack.c.b16 %v284, %v283
    %v300 = vpack.c.b16 %v286, %v285
    %v301 = vpack.c.b16 %v288, %v287
    %v302 = vpack.c.b16 %v290, %v289
    %v303 = vpack.c.b16 %v292, %v291
    %v304 = vpack.c.b16 %v294, %v293
    %v305 = vpack.c.b16 %v296, %v295
    %v306 = vpack.c.b16 %v298, %v297
    %315 = vmatprep.subr.bf16.mxu0 0
    %316 = vmatpush1.bf16.msra.mxu0 %v306
    %317 = vmatprep.subr.bf16.mxu0 0
    %318 = vmatpush1.bf16.msra.mxu0 %v305
    %319 = vmatprep.subr.bf16.mxu0 0
    %320 = vmatpush1.bf16.msra.mxu0 %v304
    %321 = vmatprep.subr.bf16.mxu0 0
    %322 = vmatpush1.bf16.msra.mxu0 %v303
    %323 = vmatprep.subr.bf16.mxu0 0
    %324 = vmatpush1.bf16.msra.mxu0 %v302
    %325 = vmatprep.subr.bf16.mxu0 0
    %326 = vmatpush1.bf16.msra.mxu0 %v301
    %327 = vmatprep.subr.bf16.mxu0 0
    %328 = vmatpush1.bf16.msra.mxu0 %v300
    %329 = vmatprep.subr.bf16.mxu0 0
    %330 = vmatpush1.bf16.msra.mxu0 %v299
    %331 = vmatprep.subr.bf16.mxu0 0
    %332 = vmatpush2.bf16.msra.mxu0 0
    %333 = vmatprep.subr.bf16.mxu0 0
    %334 = vmatpush2.bf16.msra.mxu0 0
    %335 = vmatprep.subr.bf16.mxu0 0
    %336 = vmatpush2.bf16.msra.mxu0 0
    %337 = vmatprep.subr.bf16.mxu0 0
    %338 = vmatpush2.bf16.msra.mxu0 0
    %339 = vmatprep.subr.bf16.mxu0 0
    %340 = vmatpush2.bf16.msra.mxu0 0
    %341 = vmatprep.subr.bf16.mxu0 0
    %342 = vmatpush2.bf16.msra.mxu0 0
    %343 = vmatprep.subr.bf16.mxu0 0
    %344 = vmatpush2.bf16.msra.mxu0 0
    %345 = vmatprep.subr.bf16.mxu0 0
    %346 = vmatpush2.bf16.msra.mxu0 0
    %347 = vmatprep.mubr.bf16.mxu0 0
    %348 = vmatmul.mubr.bf16.gmra.mxu0 %v243
    %v349 = vpop.f32.mrf.mxu0
    %v350 = vadd.f32 %v265, %v349
    %v351 = vpop.f32.mrf.mxu0
    %v352 = vpop.f32.mrf.mxu0
    %v353 = vadd.f32 %v265, %v352
    %v354 = vpop.f32.mrf.mxu0
    %355 = vdwg.mxu0
    %vm356 = vcmask 64512
    %357 = vst.msk [vmem:[%s7] sm:$0xff] %vm356, %v350
    %358 = vst.msk [vmem:[%s7 + $0x8] sm:$0xff] %vm356, %v353
    // Predicated region
    $region38: #{tpu_custom_call.1} parent=1 // pred_check
      _
    $region39: #{tpu_custom_call.1} parent=1 // pred_check_branch
      %360 = sbr.rel (0) target = $region41
    $region40: #{tpu_custom_call.1} parent=1 // pred_region
      _
    $region41: #{tpu_custom_call.1} parent=1 // pred_fallthru
      _
    // Predicated region
    $region42: #{tpu_custom_call.1} parent=1 // pred_check
      _
    $region43: #{tpu_custom_call.1} parent=1 // pred_check_branch
      %362 = sbr.rel (0) target = $region45
    $region44: #{tpu_custom_call.1} parent=1 // pred_region
      _
    $region45: #{tpu_custom_call.1} parent=1 // pred_fallthru
      _
    %363 = vsyncpa [#allocation3], 1
    %364 = vsyncpa [#allocation5], 1

// kernel: tpu_custom_call.1
$region0: #{tpu_custom_call.1}
  #allocation0 [shape = 'u32[]', space=smem, size = 0x4, offset = 0x4, fixed_abs, tag = 'smem constant byte address 0x4 - core index']
  #allocation1 [shape = 'u32[144,128]{1,0:T(1,128)}', space=vmem, size = 0x12000, scoped, tag = 'internal scratch']
  %s0 = inlined_call_operand.hbm [shape: f32[16,32], index: 0, kind: input, shape index: {}]
  %s1 = inlined_call_operand.hbm [shape: bf16[32,128], index: 1, kind: input, shape index: {}]
  %s2 = inlined_call_operand.vmem [shape: f32[1,128], index: 2, kind: input, shape index: {}]
  %s3 = inlined_call_operand.vmem [shape: bf16[128,128], index: 3, kind: input, shape index: {}]
  %s4 = inlined_call_operand.vmem [shape: f32[1,128], index: 4, kind: input, shape index: {}]
  %s5 = inlined_call_operand.vmem [shape: bf16[128,8], index: 5, kind: input, shape index: {}]
  %s6 = inlined_call_operand.vmem [shape: f32[1,8], index: 6, kind: input, shape index: {}]
  %s7 = inlined_call_operand.vmem [shape: f32[16,8], index: 7, kind: output, shape index: {}]
  %s8 = sld [smem:[#allocation0]]
  $region46: #{tpu_custom_call.1} parent=0
    _
  %s10 = ssub.s32 1, %s8
  %s11 = scalar_select 0, %s10, %s8
  $region1: #{tpu_custom_call.1} parent=0
    #allocation2 [shape = 'u8[8192]{0}', space=vmem, size = 0x2000, scoped, tag = 'input window, operand 0, single buffered']
    #allocation3 [shape = 's32[1]{0}', space=sflag, size = 0x4, scoped, tag = 'scoped memory for tpu_custom_call.1']
    #allocation4 [shape = 'u8[8192]{0}', space=vmem, size = 0x2000, scoped, tag = 'input window, operand 1, single buffered']
    #allocation5 [shape = 's32[1]{0}', space=sflag, size = 0x4, scoped, tag = 'scoped memory for tpu_custom_call.1']
    %12 = vsyncpa [#allocation3], 0
    %13 = vsyncpa [#allocation5], 0
    // Predicated region
    $region2: #{tpu_custom_call.1} parent=1 // pred_check
      _
    $region3: #{tpu_custom_call.1} parent=1 // pred_check_branch
      %15 = sbr.rel (0) target = $region5
    $region4: #{tpu_custom_call.1} parent=1 // pred_region
      %s17 = ssub.s32 256, 256
      %18 = vsyncadd [#allocation3], %s17
      %s19 = sshll.u32 [#allocation2], 4
      %s20 = int_to_ptr.vmem [resolvable:$true] %s19
      %25 = dma.hbm_to_vmem [thread:$0]  %s0, 256, %s20, [#allocation3], 128, 128, 8
    $region5: #{tpu_custom_call.1} parent=1 // pred_fallthru
      _
    // Predicated region
    $region6: #{tpu_custom_call.1} parent=1 // pred_check
      _
    $region7: #{tpu_custom_call.1} parent=1 // pred_check_branch
      %27 = sbr.rel (0) target = $region9
    $region8: #{tpu_custom_call.1} parent=1 // pred_region
      %s29 = ssub.s32 256, 256
      %30 = vsyncadd [#allocation5], %s29
      %s31 = sshll.u32 [#allocation4], 4
      %s32 = int_to_ptr.vmem [resolvable:$true] %s31
      %37 = dma.hbm_to_vmem [thread:$0]  %s1, 256, %s32, [#allocation5], 64, 64, 4
    $region9: #{tpu_custom_call.1} parent=1 // pred_fallthru
      _
    // Predicated region
    $region10: #{tpu_custom_call.1} parent=1 // pred_check
      _
    $region11: #{tpu_custom_call.1} parent=1 // pred_check_branch
      %39 = sbr.rel (0) target = $region13
    $region12: #{tpu_custom_call.1} parent=1 // pred_region
      _
    $region13: #{tpu_custom_call.1} parent=1 // pred_fallthru
      _
    // Predicated region
    $region14: #{tpu_custom_call.1} parent=1 // pred_check
      _
    $region15: #{tpu_custom_call.1} parent=1 // pred_check_branch
      %41 = sbr.rel (0) target = $region17
    $region16: #{tpu_custom_call.1} parent=1 // pred_region
      _
    $region17: #{tpu_custom_call.1} parent=1 // pred_fallthru
      _
    // Predicated region
    $region18: #{tpu_custom_call.1} parent=1 // pred_check
      _
    $region19: #{tpu_custom_call.1} parent=1 // pred_check_branch
      %43 = sbr.rel (0) target = $region21
    $region20: #{tpu_custom_call.1} parent=1 // pred_region
      _
    $region21: #{tpu_custom_call.1} parent=1 // pred_fallthru
      _
    // Predicated region
    $region22: #{tpu_custom_call.1} parent=1 // pred_check
      _
    $region23: #{tpu_custom_call.1} parent=1 // pred_check_branch
      %45 = sbr.rel (0) target = $region25
    $region24: #{tpu_custom_call.1} parent=1 // pred_region
      _
    $region25: #{tpu_custom_call.1} parent=1 // pred_fallthru
      _
    // Predicated region
    $region26: #{tpu_custom_call.1} parent=1 // pred_check
      _
    $region27: #{tpu_custom_call.1} parent=1 // pred_check_branch
      %47 = sbr.rel (0) target = $region29
    $region28: #{tpu_custom_call.1} parent=1 // pred_region
      _
    $region29: #{tpu_custom_call.1} parent=1 // pred_fallthru
      _
    // Predicated region
    $region30: #{tpu_custom_call.1} parent=1 // pred_check
      _
    $region31: #{tpu_custom_call.1} parent=1 // pred_check_branch
      %49 = sbr.rel (0) target = $region33
    $region32: #{tpu_custom_call.1} parent=1 // pred_region
      %50 = dma.done [#allocation3], 256
    $region33: #{tpu_custom_call.1} parent=1 // pred_fallthru
      _
    // Predicated region
    $region34: #{tpu_custom_call.1} parent=1 // pred_check
      _
    $region35: #{tpu_custom_call.1} parent=1 // pred_check_branch
      %52 = sbr.rel (0) target = $region37
    $region36: #{tpu_custom_call.1} parent=1 // pred_region
      %53 = dma.done [#allocation5], 256
    $region37: #{tpu_custom_call.1} parent=1 // pred_fallthru
      _
    %v55 = vld [vmem:[#allocation2] sm:$0xff]
    %v56 = vld [vmem:[#allocation2 + $0x8] sm:$0xff]
    %v57 = vpack.c.bf16 %v56, %v55
    %v58 = vld [vmem:[#allocation4] sm:$0xf]
    %v59 = vld [vmem:[#allocation4 + $0x4] sm:$0xf]
    %v60 = vld [vmem:[#allocation4 + $0x8] sm:$0xf]
    %v61 = vld [vmem:[#allocation4 + $0xc] sm:$0xf]
    %v62 = vld [vmem:[%s2] sm:$0x1]
    %v64 = vlaneseq
    %v65 = vshrl.u32 %v64, 7
    %v66 = vsub.s32 0, %v65
    %v67 = vrot.slane %v62, %v66
    %v73 = vunpack.c.l.b16 %v58
    %v74 = vunpack.c.l.b16 %v59
    %v75 = vunpack.c.l.b16 %v60
    %v76 = vunpack.c.l.b16 %v61
    %v77 = vpack.c.b16 %v74, %v73
    %v78 = vpack.c.b16 %v76, %v75
    %vm81 = vcmask 261120
    %v83 = vsel %vm81, %v57, 0
    %85 = vmatprep.subr.bf16.mxu0 0
    %86 = vmatpush1.bf16.msra.mxu0 0
    %87 = vmatprep.subr.bf16.mxu0 0
    %88 = vmatpush1.bf16.msra.mxu0 0
    %89 = vmatprep.subr.bf16.mxu0 0
    %90 = vmatpush1.bf16.msra.mxu0 0
    %91 = vmatprep.subr.bf16.mxu0 0
    %92 = vmatpush1.bf16.msra.mxu0 0
    %93 = vmatprep.subr.bf16.mxu0 0
    %94 = vmatpush1.bf16.msra.mxu0 0
    %95 = vmatprep.subr.bf16.mxu0 0
    %96 = vmatpush1.bf16.msra.mxu0 0
    %97 = vmatprep.subr.bf16.mxu0 0
    %98 = vmatpush1.bf16.msra.mxu0 %v78
    %99 = vmatprep.subr.bf16.mxu0 0
    %100 = vmatpush1.bf16.msra.mxu0 %v77
    %101 = vmatprep.subr.bf16.mxu0 0
    %102 = vmatpush2.bf16.msra.mxu0 0
    %103 = vmatprep.subr.bf16.mxu0 0
    %104 = vmatpush2.bf16.msra.mxu0 0
    %105 = vmatprep.subr.bf16.mxu0 0
    %106 = vmatpush2.bf16.msra.mxu0 0
    %107 = vmatprep.subr.bf16.mxu0 0
    %108 = vmatpush2.bf16.msra.mxu0 0
    %109 = vmatprep.subr.bf16.mxu0 0
    %110 = vmatpush2.bf16.msra.mxu0 0
    %111 = vmatprep.subr.bf16.mxu0 0
    %112 = vmatpush2.bf16.msra.mxu0 0
    %113 = vmatprep.subr.bf16.mxu0 0
    %114 = vmatpush2.bf16.msra.mxu0 0
    %115 = vmatprep.subr.bf16.mxu0 0
    %116 = vmatpush2.bf16.msra.mxu0 0
    %117 = vmatprep.mubr.bf16.mxu0 0
    %118 = vmatmul.mubr.bf16.gmra.mxu0 %v83
    %v119 = vpop.f32.mrf.mxu0
    %v120 = vadd.f32 %v67, %v119
    %v121 = vpop.f32.mrf.mxu0
    %v122 = vpop.f32.mrf.mxu0
    %v123 = vadd.f32 %v67, %v122
    %v124 = vpop.f32.mrf.mxu0
    %125 = vdwg.mxu0
    %v126 = vmax.f32 %v120, 0.0
    %v127 = vmax.f32 %v123, 0.0
    %v128 = vpack.c.bf16 %v127, %v126
    %v129 = vld [vmem:[%s3] sm:$0xf]
    %v130 = vld [vmem:[%s3 + $0x4] sm:$0xf]
    %v131 = vld [vmem:[%s3 + $0x8] sm:$0xf]
    %v132 = vld [vmem:[%s3 + $0xc] sm:$0xf]
    %v133 = vld [vmem:[%s3 + $0x10] sm:$0xf]
    %v134 = vld [vmem:[%s3 + $0x14] sm:$0xf]
    %v135 = vld [vmem:[%s3 + $0x18] sm:$0xf]
    %v136 = vld [vmem:[%s3 + $0x1c] sm:$0xf]
    %v137 = vld [vmem:[%s3 + $0x20] sm:$0xf]
    %v138 = vld [vmem:[%s3 + $0x24] sm:$0xf]
    %v139 = vld [vmem:[%s3 + $0x28] sm:$0xf]
    %v140 = vld [vmem:[%s3 + $0x2c] sm:$0xf]
    %v141 = vld [vmem:[%s3 + $0x30] sm:$0xf]
    %v142 = vld [vmem:[%s3 + $0x34] sm:$0xf]
    %v143 = vld [vmem:[%s3 + $0x38] sm:$0xf]
    %v144 = vld [vmem:[%s3 + $0x3c] sm:$0xf]
    %v145 = vld [vmem:[%s4] sm:$0x1]
    %v147 = vlaneseq
    %v148 = vshrl.u32 %v147, 7
    %v149 = vsub.s32 0, %v148
    %v150 = vrot.slane %v145, %v149
    %v168 = vunpack.c.l.b16 %v129
    %v169 = vunpack.c.l.b16 %v130
    %v170 = vunpack.c.l.b16 %v131
    %v171 = vunpack.c.l.b16 %v132
    %v172 = vunpack.c.l.b16 %v133
    %v173 = vunpack.c.l.b16 %v134
    %v174 = vunpack.c.l.b16 %v135
    %v175 = vunpack.c.l.b16 %v136
    %v176 = vunpack.c.l.b16 %v137
    %v177 = vunpack.c.l.b16 %v138
    %v178 = vunpack.c.l.b16 %v139
    %v179 = vunpack.c.l.b16 %v140
    %v180 = vunpack.c.l.b16 %v141
    %v181 = vunpack.c.l.b16 %v142
    %v182 = vunpack.c.l.b16 %v143
    %v183 = vunpack.c.l.b16 %v144
    %v184 = vpack.c.b16 %v169, %v168
    %v185 = vpack.c.b16 %v171, %v170
    %v186 = vpack.c.b16 %v173, %v172
    %v187 = vpack.c.b16 %v175, %v174
    %v188 = vpack.c.b16 %v177, %v176
    %v189 = vpack.c.b16 %v179, %v178
    %v190 = vpack.c.b16 %v181, %v180
    %v191 = vpack.c.b16 %v183, %v182
    %200 = vmatprep.subr.bf16.mxu0 0
    %201 = vmatpush1.bf16.msra.mxu0 %v191
    %202 = vmatprep.subr.bf16.mxu0 0
    %203 = vmatpush1.bf16.msra.mxu0 %v190
    %204 = vmatprep.subr.bf16.mxu0 0
    %205 = vmatpush1.bf16.msra.mxu0 %v189
    %206 = vmatprep.subr.bf16.mxu0 0
    %207 = vmatpush1.bf16.msra.mxu0 %v188
    %208 = vmatprep.subr.bf16.mxu0 0
    %209 = vmatpush1.bf16.msra.mxu0 %v187
    %210 = vmatprep.subr.bf16.mxu0 0
    %211 = vmatpush1.bf16.msra.mxu0 %v186
    %212 = vmatprep.subr.bf16.mxu0 0
    %213 = vmatpush1.bf16.msra.mxu0 %v185
    %214 = vmatprep.subr.bf16.mxu0 0
    %215 = vmatpush1.bf16.msra.mxu0 %v184
    %216 = vmatprep.subr.bf16.mxu0 0
    %217 = vmatpush2.bf16.msra.mxu0 0
    %218 = vmatprep.subr.bf16.mxu0 0
    %219 = vmatpush2.bf16.msra.mxu0 0
    %220 = vmatprep.subr.bf16.mxu0 0
    %221 = vmatpush2.bf16.msra.mxu0 0
    %222 = vmatprep.subr.bf16.mxu0 0
    %223 = vmatpush2.bf16.msra.mxu0 0
    %224 = vmatprep.subr.bf16.mxu0 0
    %225 = vmatpush2.bf16.msra.mxu0 0
    %226 = vmatprep.subr.bf16.mxu0 0
    %227 = vmatpush2.bf16.msra.mxu0 0
    %228 = vmatprep.subr.bf16.mxu0 0
    %229 = vmatpush2.bf16.msra.mxu0 0
    %230 = vmatprep.subr.bf16.mxu0 0
    %231 = vmatpush2.bf16.msra.mxu0 0
    %232 = vmatprep.mubr.bf16.mxu0 0
    %233 = vmatmul.mubr.bf16.gmra.mxu0 %v128
    %v234 = vpop.f32.mrf.mxu0
    %v235 = vadd.f32 %v150, %v234
    %v236 = vpop.f32.mrf.mxu0
    %v237 = vpop.f32.mrf.mxu0
    %v238 = vadd.f32 %v150, %v237
    %v239 = vpop.f32.mrf.mxu0
    %240 = vdwg.mxu0
    %v241 = vmax.f32 %v235, 0.0
    %v242 = vmax.f32 %v238, 0.0
    %v243 = vpack.c.bf16 %v242, %v241
    %v244 = vld [vmem:[%s5] sm:$0xf]
    %v245 = vld [vmem:[%s5 + $0x4] sm:$0xf]
    %v246 = vld [vmem:[%s5 + $0x8] sm:$0xf]
    %v247 = vld [vmem:[%s5 + $0xc] sm:$0xf]
    %v248 = vld [vmem:[%s5 + $0x10] sm:$0xf]
    %v249 = vld [vmem:[%s5 + $0x14] sm:$0xf]
    %v250 = vld [vmem:[%s5 + $0x18] sm:$0xf]
    %v251 = vld [vmem:[%s5 + $0x1c] sm:$0xf]
    %v252 = vld [vmem:[%s5 + $0x20] sm:$0xf]
    %v253 = vld [vmem:[%s5 + $0x24] sm:$0xf]
    %v254 = vld [vmem:[%s5 + $0x28] sm:$0xf]
    %v255 = vld [vmem:[%s5 + $0x2c] sm:$0xf]
    %v256 = vld [vmem:[%s5 + $0x30] sm:$0xf]
    %v257 = vld [vmem:[%s5 + $0x34] sm:$0xf]
    %v258 = vld [vmem:[%s5 + $0x38] sm:$0xf]
    %v259 = vld [vmem:[%s5 + $0x3c] sm:$0xf]
    %v260 = vld [vmem:[%s6] sm:$0x1]
    %v262 = vlaneseq
    %v263 = vshrl.u32 %v262, 7
    %v264 = vsub.s32 0, %v263
    %v265 = vrot.slane %v260, %v264
    %v283 = vunpack.c.l.b16 %v244
    %v284 = vunpack.c.l.b16 %v245
    %v285 = vunpack.c.l.b16 %v246
    %v286 = vunpack.c.l.b16 %v247
    %v287 = vunpack.c.l.b16 %v248
    %v288 = vunpack.c.l.b16 %v249
    %v289 = vunpack.c.l.b16 %v250
    %v290 = vunpack.c.l.b16 %v251
    %v291 = vunpack.c.l.b16 %v252
    %v292 = vunpack.c.l.b16 %v253
    %v293 = vunpack.c.l.b16 %v254
    %v294 = vunpack.c.l.b16 %v255
    %v295 = vunpack.c.l.b16 %v256
    %v296 = vunpack.c.l.b16 %v257
    %v297 = vunpack.c.l.b16 %v258
    %v298 = vunpack.c.l.b16 %v259
    %v299 = vpack.c.b16 %v284, %v283
    %v300 = vpack.c.b16 %v286, %v285
    %v301 = vpack.c.b16 %v288, %v287
    %v302 = vpack.c.b16 %v290, %v289
    %v303 = vpack.c.b16 %v292, %v291
    %v304 = vpack.c.b16 %v294, %v293
    %v305 = vpack.c.b16 %v296, %v295
    %v306 = vpack.c.b16 %v298, %v297
    %315 = vmatprep.subr.bf16.mxu0 0
    %316 = vmatpush1.bf16.msra.mxu0 %v306
    %317 = vmatprep.subr.bf16.mxu0 0
    %318 = vmatpush1.bf16.msra.mxu0 %v305
    %319 = vmatprep.subr.bf16.mxu0 0
    %320 = vmatpush1.bf16.msra.mxu0 %v304
    %321 = vmatprep.subr.bf16.mxu0 0
    %322 = vmatpush1.bf16.msra.mxu0 %v303
    %323 = vmatprep.subr.bf16.mxu0 0
    %324 = vmatpush1.bf16.msra.mxu0 %v302
    %325 = vmatprep.subr.bf16.mxu0 0
    %326 = vmatpush1.bf16.msra.mxu0 %v301
    %327 = vmatprep.subr.bf16.mxu0 0
    %328 = vmatpush1.bf16.msra.mxu0 %v300
    %329 = vmatprep.subr.bf16.mxu0 0
    %330 = vmatpush1.bf16.msra.mxu0 %v299
    %331 = vmatprep.subr.bf16.mxu0 0
    %332 = vmatpush2.bf16.msra.mxu0 0
    %333 = vmatprep.subr.bf16.mxu0 0
    %334 = vmatpush2.bf16.msra.mxu0 0
    %335 = vmatprep.subr.bf16.mxu0 0
    %336 = vmatpush2.bf16.msra.mxu0 0
    %337 = vmatprep.subr.bf16.mxu0 0
    %338 = vmatpush2.bf16.msra.mxu0 0
    %339 = vmatprep.subr.bf16.mxu0 0
    %340 = vmatpush2.bf16.msra.mxu0 0
    %341 = vmatprep.subr.bf16.mxu0 0
    %342 = vmatpush2.bf16.msra.mxu0 0
    %343 = vmatprep.subr.bf16.mxu0 0
    %344 = vmatpush2.bf16.msra.mxu0 0
    %345 = vmatprep.subr.bf16.mxu0 0
    %346 = vmatpush2.bf16.msra.mxu0 0
    %347 = vmatprep.mubr.bf16.mxu0 0
    %348 = vmatmul.mubr.bf16.gmra.mxu0 %v243
    %v349 = vpop.f32.mrf.mxu0
    %v350 = vadd.f32 %v265, %v349
    %v351 = vpop.f32.mrf.mxu0
    %v352 = vpop.f32.mrf.mxu0
    %v353 = vadd.f32 %v265, %v352
    %v354 = vpop.f32.mrf.mxu0
    %355 = vdwg.mxu0
    %vm356 = vcmask 64512
    %357 = vst.msk [vmem:[%s7] sm:$0xff] %vm356, %v350
    %358 = vst.msk [vmem:[%s7 + $0x8] sm:$0xff] %vm356, %v353
    // Predicated region
    $region38: #{tpu_custom_call.1} parent=1 // pred_check
      _
    $region39: #{tpu_custom_call.1} parent=1 // pred_check_branch
      %360 = sbr.rel (0) target = $region41
    $region40: #{tpu_custom_call.1} parent=1 // pred_region
      _
    $region41: #{tpu_custom_call.1} parent=1 // pred_fallthru
      _
    // Predicated region
    $region42: #{tpu_custom_call.1} parent=1 // pred_check
      _
    $region43: #{tpu_custom_call.1} parent=1 // pred_check_branch
      %362 = sbr.rel (0) target = $region45
    $region44: #{tpu_custom_call.1} parent=1 // pred_region
      _
    $region45: #{tpu_custom_call.1} parent=1 // pred_fallthru
      _
    %363 = vsyncpa [#allocation3], 1
    %364 = vsyncpa [#allocation5], 1

</llo_original>
